<compile_context>
chip_gen: v5e
topology: v5e:2x2
jax: 0.10.0
libtpu: 0.0.40
codegen_flags: <defaults>
</compile_context>

<pallas_src>
import jax
import jax.numpy as jnp
from jax.experimental import pallas as pl
from jax.experimental.pallas import tpu as pltpu


def _tanh_gate_kernel(x_ref, o_ref):
    # x_ref: (BN, 2, TP, TL); half 0 -> sigmoid, half 1 -> tanh.
    a = x_ref[:, 0].astype(jnp.float32)
    b = x_ref[:, 1].astype(jnp.float32)
    # sigmoid(x) == 0.5 * (tanh(0.5*x) + 1): EUP tanh, no divide.
    sig = 0.5 * (jnp.tanh(0.5 * a) + 1.0)
    o_ref[...] = (sig * jnp.tanh(b)).astype(o_ref.dtype)


def _round_up(x, m):
    return ((x + m - 1) // m) * m


def _padded_set_bytes(bn, tp, tl, itemsize, pack):
    # Two input half-blocks + one output block, with (sublane, lane) padding.
    return 3 * bn * _round_up(tp, pack) * _round_up(tl, 128) * itemsize


def _vmem_capacity_bytes():
    try:
        return int(pltpu.get_tpu_info().vmem_capacity_bytes)
    except Exception:
        return 64 * 1024 * 1024  # conservative fallback (v7x per-TC physical VMEM)


def _choose_tiling(n, p, l, itemsize, pack, budget):
    """Pick (bn, tp, tl) so the padded block set stays within `budget` bytes."""
    pp = _round_up(p, pack)
    pll = _round_up(l, 128)
    unit = 3 * pp * pll * itemsize           # one batch element, full (p, l)
    if unit <= budget:
        bn = max(1, min(n, budget // unit))
        tp, tl = p, l
    else:
        bn = 1
        row = 3 * pack * pll * itemsize      # one sublane pack of rows, full l
        if row <= budget:
            tl = l                           # keep DMA contiguous, tile piv
            tp = min(p, (budget // row) * pack)
        else:
            tp = min(p, pack)                # huge L: tile lanes too
            lane_budget = budget // (3 * _round_up(tp, pack) * itemsize)
            tl = min(l, max(128, (lane_budget // 128) * 128))
    return bn, tp, tl


def _ensure_multi_step(n, p, l, bn, tp, tl, itemsize, pack):
    """Split the grid so v7x's two TCs both get work and DMA overlaps compute."""
    total = 3 * n * _round_up(p, pack) * _round_up(l, 128) * itemsize
    if total < (1 << 20):
        desired = 1
    elif total < (4 << 20):
        desired = 2
    else:
        desired = 4

    def steps(bn_, tp_, tl_):
        return pl.cdiv(n, bn_) * pl.cdiv(p, tp_) * pl.cdiv(l, tl_)

    while steps(bn, tp, tl) < desired:
        if bn > 1:
            bn = (bn + 1) // 2
        elif tl > 128:
            tl = max(128, _round_up(tl // 2, 128))
        elif tp > pack:
            tp = max(pack, _round_up(tp // 2, pack))
        else:
            break
    return bn, tp, tl


def tanh_gate(value: jax.Array) -> jax.Array:
    """Pallas implementation of _TanhGate.forward for an (N, C, L) input."""
    n, c, l = value.shape
    assert c % 2 == 0, "channel dimension must be even"
    piv = c // 2
    itemsize = value.dtype.itemsize
    pack = 8 * max(1, 4 // itemsize)         # sublane pack: 8 f32 / 16 bf16 / 32 int8

    # Metadata-only relayout.  Half selection lives on a leading axis so the
    # kernel never slices across the (sublane, lane) tile.  If L is lane-sparse
    # but piv*L is a multiple of 128, collapse to a lane-dense (piv*L/128, 128)
    # trailing layout (each half is contiguous per batch element, so pairing of
    # the two halves is preserved element-for-element).
    if l % 128 == 0 or (piv * l) % 128 != 0:
        p_eff, l_eff = piv, l
    else:
        p_eff, l_eff = (piv * l) // 128, 128
    x = value.reshape(n, 2, p_eff, l_eff)

    cap = _vmem_capacity_bytes()
    budget = min(10 << 20, cap // 8)         # per-block-set budget (3 blocks)
    bn, tp, tl = _choose_tiling(n, p_eff, l_eff, itemsize, pack, budget)
    bn, tp, tl = _ensure_multi_step(n, p_eff, l_eff, bn, tp, tl, itemsize, pack)

    set_bytes = _padded_set_bytes(bn, tp, tl, itemsize, pack)
    need = 2 * set_bytes                     # double-buffered input + output windows
    vmem_limit = int(min(max(2 * need, 24 << 20), cap // 2))

    grid = (pl.cdiv(n, bn), pl.cdiv(p_eff, tp), pl.cdiv(l_eff, tl))

    # TODO(synk): optional bf16 in-kernel math on v6e/v7x (f32 kept everywhere
    # since the kernel is HBM-bound; v5e has no bf16 VPU/EUP).
    out = pl.pallas_call(
        _tanh_gate_kernel,
        out_shape=jax.ShapeDtypeStruct((n, p_eff, l_eff), value.dtype),
        grid_spec=pltpu.PrefetchScalarGridSpec(
            num_scalar_prefetch=0,
            grid=grid,
            in_specs=[
                pl.BlockSpec((bn, 2, tp, tl), lambda i, j, k: (i, 0, j, k)),
            ],
            out_specs=pl.BlockSpec((bn, tp, tl), lambda i, j, k: (i, j, k)),
        ),
        compiler_params=pltpu.CompilerParams(
            dimension_semantics=("parallel", "parallel", "parallel"),
            vmem_limit_bytes=vmem_limit,
        ),
    )(x)
    return out.reshape(n, piv, l)


def tanh_gate_reference(value: jax.Array) -> jax.Array:
    """Pure-JAX reference matching the PyTorch forward."""
    piv = value.shape[1] // 2
    return jax.nn.sigmoid(value[:, :piv, :]) * jnp.tanh(value[:, piv:, :])


if __name__ == "__main__":
    key = jax.random.PRNGKey(0)
    k1, k2, k3, k4 = jax.random.split(key, 4)

    # Tiny shape consistent with the module: (batch=2, channels=8, seq=16).
    x1 = jax.random.normal(k1, (2, 8, 16), dtype=jnp.float32)
    o1 = jax.block_until_ready(tanh_gate(x1))
    assert o1.shape == (2, 4, 16)
    assert jnp.allclose(o1, tanh_gate_reference(x1), atol=1e-5, rtol=1e-5)

    # L a multiple of 128, piv not sublane-pack aligned (padded footprint path).
    x2 = jax.random.normal(k2, (3, 12, 2304), dtype=jnp.float32)
    o2 = jax.block_until_ready(tanh_gate(x2))
    assert o2.shape == (3, 6, 2304)
    assert jnp.allclose(o2, tanh_gate_reference(x2), atol=1e-5, rtol=1e-5)

    # Medium shape exercising the guaranteed multi-step grid / L tiling.
    x3 = jax.random.normal(k3, (2, 256, 2048), dtype=jnp.float32)
    o3 = jax.block_until_ready(tanh_gate(x3))
    assert o3.shape == (2, 128, 2048)
    assert jnp.allclose(o3, tanh_gate_reference(x3), atol=1e-5, rtol=1e-5)

    # bf16 with a short, lane-sparse sequence: exercises the collapsed
    # lane-dense layout and the bf16 sublane pack (16).
    x4 = jax.random.normal(k4, (2, 16, 48), dtype=jnp.bfloat16)
    o4 = jax.block_until_ready(tanh_gate(x4))
    assert o4.shape == (2, 8, 48)
    assert jnp.allclose(o4.astype(jnp.float32),
                        tanh_gate_reference(x4).astype(jnp.float32),
                        atol=2e-2, rtol=2e-2)

    print("KERNEL_OK")
</pallas_src>

<mosaic_0001>
module attributes {stable_mosaic.version = 11 : i64} {
  func.func @_tanh_gate_kernel(%arg0: i32, %arg1: i32, %arg2: i32, %arg3: memref<2x2x4x16xf32, #tpu.memory_space<vmem>>, %arg4: memref<2x4x16xf32, #tpu.memory_space<vmem>>) attributes {dimension_semantics = [#tpu.dimension_semantics<parallel>, #tpu.dimension_semantics<parallel>, #tpu.dimension_semantics<parallel>], iteration_bounds = array<i64: 1, 1, 1>, scalar_prefetch = 0 : i64, scratch_operands = 0 : i64, tpu.core_type = #tpu.core_type<tc>, window_params = [{transform_indices = @transform_0, window_bounds = array<i64: 2, 2, 4, 16>}, {transform_indices = @transform_1, window_bounds = array<i64: 2, 4, 16>}]} {
    %c0 = arith.constant 0 : index
    %c0_0 = arith.constant 0 : index
    %c0_1 = arith.constant 0 : index
    %c0_2 = arith.constant 0 : index
    %0 = vector.load %arg3[%c0, %c0_0, %c0_1, %c0_2] : memref<2x2x4x16xf32, #tpu.memory_space<vmem>>, vector<2x1x4x16xf32>
    %1 = vector.shape_cast %0 : vector<2x1x4x16xf32> to vector<2x4x16xf32>
    %c0_3 = arith.constant 0 : index
    %c1 = arith.constant 1 : index
    %c0_4 = arith.constant 0 : index
    %c0_5 = arith.constant 0 : index
    %2 = vector.load %arg3[%c0_3, %c1, %c0_4, %c0_5] : memref<2x2x4x16xf32, #tpu.memory_space<vmem>>, vector<2x1x4x16xf32>
    %3 = vector.shape_cast %2 : vector<2x1x4x16xf32> to vector<2x4x16xf32>
    %cst = arith.constant 5.000000e-01 : f32
    %4 = vector.broadcast %cst : f32 to vector<2x4x16xf32>
    %5 = arith.mulf %4, %1 : vector<2x4x16xf32>
    %6 = math.tanh %5 : vector<2x4x16xf32>
    %cst_6 = arith.constant 1.000000e+00 : f32
    %7 = vector.broadcast %cst_6 : f32 to vector<2x4x16xf32>
    %8 = arith.addf %6, %7 : vector<2x4x16xf32>
    %cst_7 = arith.constant 5.000000e-01 : f32
    %9 = vector.broadcast %cst_7 : f32 to vector<2x4x16xf32>
    %10 = arith.mulf %9, %8 : vector<2x4x16xf32>
    %11 = math.tanh %3 : vector<2x4x16xf32>
    %12 = arith.mulf %10, %11 : vector<2x4x16xf32>
    %c0_8 = arith.constant 0 : index
    %c0_9 = arith.constant 0 : index
    %c0_10 = arith.constant 0 : index
    %13 = vector.load %arg4[%c0_8, %c0_9, %c0_10] : memref<2x4x16xf32, #tpu.memory_space<vmem>>, vector<2x4x16xf32>
    tpu.vector_store %arg4[%c0_8, %c0_9, %c0_10], %12 {strides = array<i32>} : memref<2x4x16xf32, #tpu.memory_space<vmem>>, vector<2x4x16xf32>,
    return
  }
  func.func @transform_0(%arg0: i32, %arg1: i32, %arg2: i32) -> (i32, i32, i32, i32) {
    %c0_i32 = arith.constant 0 : i32
    %c0_i32_0 = arith.constant 0 : i32
    return %arg0, %c0_i32, %arg1, %arg2 : i32, i32, i32, i32
  }
  func.func @transform_1(%arg0: i32, %arg1: i32, %arg2: i32) -> (i32, i32, i32) {
    %c0_i32 = arith.constant 0 : i32
    return %arg0, %arg1, %arg2 : i32, i32, i32
  }
}

</mosaic_0001>

<llo_original>
// kernel: tpu_custom_call.1
$region0: #{tpu_custom_call.1}
  #allocation0 [shape = 'u32[]', space=smem, size = 0x4, offset = 0x4, fixed_abs, tag = 'smem constant byte address 0x4 - core index']
  #allocation1 [shape = 'u32[72,128]{1,0:T(1,128)}', space=vmem, size = 0x9000, scoped, tag = 'internal scratch']
  %s0 = inlined_call_operand.hbm [shape: f32[2,2,4,16], index: 0, kind: input, shape index: {}]
  %s1 = inlined_call_operand.hbm [shape: f32[2,4,16], index: 1, kind: output, shape index: {}]
  %s2 = sld [smem:[#allocation0]]
  $region18: #{tpu_custom_call.1} parent=0
    _
  %s4 = ssub.s32 1, %s2
  %s5 = scalar_select 0, %s4, %s2
  $region1: #{tpu_custom_call.1} parent=0
    #allocation2 [shape = 'u8[8192]{0}', space=vmem, size = 0x2000, scoped, tag = 'input window, operand 0, single buffered']
    #allocation3 [shape = 's32[1]{0}', space=sflag, size = 0x4, scoped, tag = 'scoped memory for tpu_custom_call.1']
    #allocation4 [shape = 's32[1]{0}', space=sflag, size = 0x4, scoped, tag = 'scoped memory for tpu_custom_call.1']
    #allocation5 [shape = 'u8[4096]{0}', space=vmem, size = 0x1000, scoped, tag = 'output window, operand 0, single buffered']
    %6 = vsyncpa [#allocation3], 0
    %7 = vsyncpa [#allocation4], 0
    // Predicated region
    $region2: #{tpu_custom_call.1} parent=1 // pred_check
      _
    $region3: #{tpu_custom_call.1} parent=1 // pred_check_branch
      %9 = sbr.rel (0) target = $region5
    $region4: #{tpu_custom_call.1} parent=1 // pred_region
      %11 = vsyncadd [#allocation3], 0
      %s12 = sshll.u32 %s0, 4
      %s13 = int_to_ptr.hbm [resolvable:$true] %s12
      %s14 = sshll.u32 [#allocation2], 4
      %s15 = int_to_ptr.vmem [resolvable:$true] %s14
      %20 = dma.hbm_to_vmem [thread:$0]  %s13, 256, %s15, [#allocation3], 64, 64, 4
    $region5: #{tpu_custom_call.1} parent=1 // pred_fallthru
      _
    // Predicated region
    $region6: #{tpu_custom_call.1} parent=1 // pred_check
      _
    $region7: #{tpu_custom_call.1} parent=1 // pred_check_branch
      %22 = sbr.rel (0) target = $region9
    $region8: #{tpu_custom_call.1} parent=1 // pred_region
      %24 = dma.done [#allocation3], 256
    $region9: #{tpu_custom_call.1} parent=1 // pred_fallthru
      _
    %v25 = vld [vmem:[#allocation2] sm:$0xf]
    %v26 = vld [vmem:[#allocation2 + $0x8] sm:$0xf]
    %s27 = scalar_lea.vmem [#allocation2], 4
    %v28 = vld [vmem:[%s27] sm:$0xf]
    %v29 = vld [vmem:[%s27 + $0x8] sm:$0xf]
    %v30 = vmul.f32 %v25, 0.5
    %v31 = vmul.f32 %v26, 0.5
    %v32 = vtanh.pop %v30
    %v33 = vtanh.pop %v31
    %v34 = vadd.f32 %v32, 1.0
    %v35 = vadd.f32 %v33, 1.0
    %v36 = vmul.f32 %v34, 0.5
    %v37 = vmul.f32 %v35, 0.5
    %v38 = vtanh.pop %v28
    %v39 = vtanh.pop %v29
    %v40 = vmul.f32 %v36, %v38
    %v41 = vmul.f32 %v37, %v39
    %vm42 = vcmask 125952
    %43 = vst.msk [vmem:[#allocation5] sm:$0xf] %vm42, %v40
    %44 = vst.msk [vmem:[#allocation5 + $0x4] sm:$0xf] %vm42, %v41
    // Predicated region
    $region10: #{tpu_custom_call.1} parent=1 // pred_check
      _
    $region11: #{tpu_custom_call.1} parent=1 // pred_check_branch
      %46 = sbr.rel (0) target = $region13
    $region12: #{tpu_custom_call.1} parent=1 // pred_region
      %48 = vsyncadd [#allocation4], 0
      %s49 = sshll.u32 [#allocation5], 4
      %s50 = int_to_ptr.vmem [resolvable:$true] %s49
      %s51 = sshll.u32 %s1, 4
      %s52 = int_to_ptr.hbm [resolvable:$true] %s51
      %57 = dma.vmem_to_hbm [thread:$0]  %s50, 128, %s52, [#allocation4], 64, 64, 4
    $region13: #{tpu_custom_call.1} parent=1 // pred_fallthru
      _
    // Predicated region
    $region14: #{tpu_custom_call.1} parent=1 // pred_check
      _
    $region15: #{tpu_custom_call.1} parent=1 // pred_check_branch
      %59 = sbr.rel (0) target = $region17
    $region16: #{tpu_custom_call.1} parent=1 // pred_region
      %61 = dma.done [#allocation4], 128
    $region17: #{tpu_custom_call.1} parent=1 // pred_fallthru
      _
    %62 = vsyncpa [#allocation3], 1
    %63 = vsyncpa [#allocation4], 1

</llo_original>
